<compile_context>
chip_gen: v6e
topology: v6e:2x2x1
jax: 0.10.0
libtpu: 0.0.40
codegen_flags: <defaults>
</compile_context>

<pallas_src>
import numpy as np
import jax
import jax.numpy as jnp
from jax.experimental import pallas as pl
from jax.experimental.pallas import tpu as pltpu


# ----------------------------------------------------------------------------
# Problem definition (synthetic heterograph, matches the PyTorch module config)
# ----------------------------------------------------------------------------
TARGET = "authentication"
NTYPES = ["authentication", "user", "computer"]
CANONICAL_ETYPES = [
    ("user", "user_auth", "authentication"),
    ("computer", "comp_auth", "authentication"),
    ("authentication", "auth_user", "user"),
    ("authentication", "auth_comp", "computer"),
]
NUM_NODES = {"authentication": 16, "user": 12, "computer": 10}

IN_SIZE = 24
HIDDEN_SIZE = 32
OUT_SIZE = 1
N_LAYERS = 2          # -> 2 HeteroRGCNLayer + final nn.Linear
EMBEDDING_SIZE = 16

# Padded sizes (sublane / lane alignment).
NPAD = int(np.ceil(max(NUM_NODES.values()) / 8.0)) * 8     # 16 rows (sublanes)
DPAD = 128                                                  # lane-dense width

NT_IDX = {nt: i for i, nt in enumerate(NTYPES)}
SRC_IDX = [NT_IDX[s] for (s, _e, _d) in CANONICAL_ETYPES]
DST_IDX = [NT_IDX[d] for (_s, _e, d) in CANONICAL_ETYPES]
N_NT = len(NTYPES)
N_ET = len(CANONICAL_ETYPES)


# ----------------------------------------------------------------------------
# Fused Pallas kernel: whole HeteroRGCN forward in one call
# ----------------------------------------------------------------------------
def _leaky_relu(x):
    return jnp.where(x >= 0.0, x, 0.01 * x)   # F.leaky_relu default slope


def make_fused_forward_kernel(n_layers):
    def kernel(*refs):
        pos = 0
        h_ref = refs[pos]; pos += 1            # (N_NT, NPAD, DPAD) stacked feats
        a_ref = refs[pos]; pos += 1            # (N_ET, NPAD, NPAD) stacked A_norm
        layer_refs = []
        for _ in range(n_layers):
            layer_refs.append((refs[pos], refs[pos + 1]))  # W:(N_ET,DPAD,DPAD), b:(N_ET,1,DPAD)
            pos += 2
        w_out_ref = refs[pos]; b_out_ref = refs[pos + 1]; pos += 2
        out_ref = refs[pos]

        # Initial feature dict (target features + learned embeddings), kept
        # resident in VMEM/vregs for the whole forward.
        h = [h_ref[i] for i in range(N_NT)]    # each (NPAD, DPAD)

        for li in range(n_layers):
            w_ref, b_ref = layer_refs[li]
            if li != 0:
                # Inter-layer leaky_relu fused into the same kernel (VPU filler).
                h = [x if x is None else _leaky_relu(x) for x in h]
            new_h = [None] * N_NT
            for ei in range(N_ET):
                si, di = SRC_IDX[ei], DST_IDX[ei]
                if li == n_layers - 1 and NTYPES[di] != TARGET:
                    # Last RGCN layer: only the target ntype feeds the output head.
                    continue
                # per-message Linear then mean aggregation == A_norm @ (XW + b)
                wh = jnp.dot(h[si], w_ref[ei],
                             preferred_element_type=jnp.float32) + b_ref[ei]
                contrib = jnp.dot(a_ref[ei], wh,
                                  preferred_element_type=jnp.float32)
                # multi_update_all cross-etype reducer: 'sum'
                new_h[di] = contrib if new_h[di] is None else new_h[di] + contrib
            h = new_h

        # Final nn.Linear(hidden, out) on target nodes; output is padded to
        # 128 lanes so the store is lane-dense (real logit lives in column 0).
        out_ref[...] = (
            jnp.dot(h[NT_IDX[TARGET]], w_out_ref[...],
                    preferred_element_type=jnp.float32)
            + b_out_ref[...]
        )

    return kernel


def _pad2(x, rows, cols):
    r, c = x.shape
    return jnp.pad(x, ((0, rows - r), (0, cols - c)))


def hetero_rgcn_forward(params, adj, features):
    """Single fused pallas_call for the whole HeteroRGCN.forward."""
    n_layers = len(params["rgcn_layers"])

    # ---- pack the whole problem into lane/sublane-aligned stacked operands ----
    h0 = {TARGET: features, **params["embed"]}
    h_stack = jnp.stack([_pad2(h0[nt], NPAD, DPAD) for nt in NTYPES])
    a_stack = jnp.stack([_pad2(adj[etype], NPAD, NPAD)
                         for (_s, etype, _d) in CANONICAL_ETYPES])

    args = [h_stack, a_stack]
    for layer in params["rgcn_layers"]:
        w_stack = jnp.stack([_pad2(layer[etype]["w"], DPAD, DPAD)
                             for (_s, etype, _d) in CANONICAL_ETYPES])
        b_stack = jnp.stack([_pad2(layer[etype]["b"].reshape(1, -1), 1, DPAD)
                             for (_s, etype, _d) in CANONICAL_ETYPES])
        args += [w_stack, b_stack]
    args.append(_pad2(params["out"]["w"], DPAD, DPAD))
    args.append(_pad2(params["out"]["b"].reshape(1, -1), 1, DPAD))

    out_pad = pl.pallas_call(
        make_fused_forward_kernel(n_layers),
        out_shape=jax.ShapeDtypeStruct((NPAD, DPAD), jnp.float32),
        in_specs=[pl.BlockSpec(memory_space=pltpu.MemorySpace.VMEM)
                  for _ in args],
        out_specs=pl.BlockSpec(memory_space=pltpu.MemorySpace.VMEM),
    )(*args)

    # slice away the lane/sublane padding
    return out_pad[:NUM_NODES[TARGET], :OUT_SIZE]


# ----------------------------------------------------------------------------
# Synthetic graph + deterministic parameters (host side)
# ----------------------------------------------------------------------------
def build_mean_adjacency(n_src, n_dst, n_edges, offset):
    """Dense mean-normalized adjacency (DGL copy_u + fn.mean)."""
    e = np.arange(n_edges)
    src = (e * 5 + offset) % n_src
    dst = (e + offset) % n_dst            # covers every dst node (n_edges >= n_dst)
    a = np.zeros((n_dst, n_src), dtype=np.float32)
    np.add.at(a, (dst, src), 1.0)
    deg = a.sum(axis=1, keepdims=True)
    return a / np.maximum(deg, 1.0)       # zero-in-degree rows stay 0 (DGL semantics)


def xavier_uniform(key, shape):
    fan_in, fan_out = shape[0], shape[1]
    bound = np.sqrt(6.0 / (fan_in + fan_out))
    return jax.random.uniform(key, shape, jnp.float32, -bound, bound)


def linear_params(key, d_in, d_out):
    kw, kb = jax.random.split(key)
    bound = 1.0 / np.sqrt(d_in)
    w = jax.random.uniform(kw, (d_in, d_out), jnp.float32, -bound, bound)
    b = jax.random.uniform(kb, (d_out,), jnp.float32, -bound, bound)
    return {"w": w, "b": b}


def init_params(key):
    keys = iter(jax.random.split(key, 64))
    params = {"embed": {}, "rgcn_layers": [], "out": None}

    # node-type embeddings for every non-target ntype (xavier_uniform)
    for ntype in NUM_NODES:
        if ntype != TARGET:
            params["embed"][ntype] = xavier_uniform(
                next(keys), (NUM_NODES[ntype], EMBEDDING_SIZE)
            )

    # layer 0: per-etype input size depends on the source node type
    layer0 = {}
    for (src, etype, _dst) in CANONICAL_ETYPES:
        d_in = IN_SIZE if src == TARGET else EMBEDDING_SIZE
        layer0[etype] = linear_params(next(keys), d_in, HIDDEN_SIZE)
    params["rgcn_layers"].append(layer0)

    # layers 1..n_layers-1: hidden -> hidden for every etype
    for _ in range(N_LAYERS - 1):
        layer = {
            etype: linear_params(next(keys), HIDDEN_SIZE, HIDDEN_SIZE)
            for (_s, etype, _d) in CANONICAL_ETYPES
        }
        params["rgcn_layers"].append(layer)

    # final nn.Linear(hidden, out) applied to target node features
    params["out"] = linear_params(next(keys), HIDDEN_SIZE, OUT_SIZE)
    return params


def build_graph():
    # TODO(synk): DGL MFG blocks g[i] are replaced by full-graph propagation
    # (equivalent semantics when every block covers the whole graph).
    adj = {}
    for i, (src, etype, dst) in enumerate(CANONICAL_ETYPES):
        adj[etype] = jnp.asarray(
            build_mean_adjacency(
                NUM_NODES[src], NUM_NODES[dst], n_edges=40, offset=i + 1
            )
        )
    return adj


# ----------------------------------------------------------------------------
if __name__ == "__main__":
    key = jax.random.PRNGKey(0)
    k_params, k_feat = jax.random.split(key)

    params = init_params(k_params)
    adj = build_graph()
    features = jax.random.normal(
        k_feat, (NUM_NODES[TARGET], IN_SIZE), dtype=jnp.float32
    )

    fwd = jax.jit(hetero_rgcn_forward)
    logits = fwd(params, adj, features)
    logits = jax.block_until_ready(logits)

    assert logits.shape == (NUM_NODES[TARGET], OUT_SIZE)
    assert bool(jnp.all(jnp.isfinite(logits)))
    print("KERNEL_OK")
</pallas_src>

<mosaic_0001>
module attributes {stable_mosaic.version = 11 : i64} {
  func.func @kernel(%arg0: memref<3x16x128xf32, #tpu.memory_space<vmem>>, %arg1: memref<4x16x16xf32, #tpu.memory_space<vmem>>, %arg2: memref<4x128x128xf32, #tpu.memory_space<vmem>>, %arg3: memref<4x1x128xf32, #tpu.memory_space<vmem>>, %arg4: memref<4x128x128xf32, #tpu.memory_space<vmem>>, %arg5: memref<4x1x128xf32, #tpu.memory_space<vmem>>, %arg6: memref<128x128xf32, #tpu.memory_space<vmem>>, %arg7: memref<1x128xf32, #tpu.memory_space<vmem>>, %arg8: memref<16x128xf32, #tpu.memory_space<vmem>>) attributes {dimension_semantics = [], scalar_prefetch = 0 : i64, scratch_operands = 0 : i64, tpu.core_type = #tpu.core_type<tc>} {
    %c0 = arith.constant 0 : index
    %c0_0 = arith.constant 0 : index
    %c0_1 = arith.constant 0 : index
    %0 = vector.load %arg0[%c0, %c0_0, %c0_1] : memref<3x16x128xf32, #tpu.memory_space<vmem>>, vector<1x16x128xf32>
    %1 = vector.shape_cast %0 : vector<1x16x128xf32> to vector<16x128xf32>
    %c2 = arith.constant 2 : index
    %c0_2 = arith.constant 0 : index
    %c0_3 = arith.constant 0 : index
    %2 = vector.load %arg2[%c2, %c0_2, %c0_3] : memref<4x128x128xf32, #tpu.memory_space<vmem>>, vector<1x128x128xf32>
    %3 = vector.shape_cast %2 : vector<1x128x128xf32> to vector<128x128xf32>
    %cst = arith.constant dense<0.000000e+00> : vector<16x128xf32>
    %4 = tpu.matmul %1, %3, %cst {dimension_numbers = #tpu.dot_dimension_numbers<[1], [0], [0], [1], [0, 0, 1, 1], [], []>} : vector<16x128xf32>, vector<128x128xf32>, vector<16x128xf32> -> vector<16x128xf32>
    %c2_4 = arith.constant 2 : index
    %c0_5 = arith.constant 0 : index
    %c0_6 = arith.constant 0 : index
    %5 = vector.load %arg3[%c2_4, %c0_5, %c0_6] : memref<4x1x128xf32, #tpu.memory_space<vmem>>, vector<1x1x128xf32>
    %6 = vector.shape_cast %5 : vector<1x1x128xf32> to vector<1x128xf32>
    %7 = vector.broadcast %6 : vector<1x128xf32> to vector<16x128xf32>
    %8 = arith.addf %4, %7 : vector<16x128xf32>
    %c2_7 = arith.constant 2 : index
    %c0_8 = arith.constant 0 : index
    %c0_9 = arith.constant 0 : index
    %9 = vector.load %arg1[%c2_7, %c0_8, %c0_9] : memref<4x16x16xf32, #tpu.memory_space<vmem>>, vector<1x16x16xf32>
    %10 = vector.shape_cast %9 : vector<1x16x16xf32> to vector<16x16xf32>
    %cst_10 = arith.constant dense<0.000000e+00> : vector<16x128xf32>
    %11 = tpu.matmul %10, %8, %cst_10 {dimension_numbers = #tpu.dot_dimension_numbers<[1], [0], [0], [1], [0, 0, 1, 1], [], []>} : vector<16x16xf32>, vector<16x128xf32>, vector<16x128xf32> -> vector<16x128xf32>
    %c3 = arith.constant 3 : index
    %c0_11 = arith.constant 0 : index
    %c0_12 = arith.constant 0 : index
    %12 = vector.load %arg2[%c3, %c0_11, %c0_12] : memref<4x128x128xf32, #tpu.memory_space<vmem>>, vector<1x128x128xf32>
    %13 = vector.shape_cast %12 : vector<1x128x128xf32> to vector<128x128xf32>
    %cst_13 = arith.constant dense<0.000000e+00> : vector<16x128xf32>
    %14 = tpu.matmul %1, %13, %cst_13 {dimension_numbers = #tpu.dot_dimension_numbers<[1], [0], [0], [1], [0, 0, 1, 1], [], []>} : vector<16x128xf32>, vector<128x128xf32>, vector<16x128xf32> -> vector<16x128xf32>
    %c3_14 = arith.constant 3 : index
    %c0_15 = arith.constant 0 : index
    %c0_16 = arith.constant 0 : index
    %15 = vector.load %arg3[%c3_14, %c0_15, %c0_16] : memref<4x1x128xf32, #tpu.memory_space<vmem>>, vector<1x1x128xf32>
    %16 = vector.shape_cast %15 : vector<1x1x128xf32> to vector<1x128xf32>
    %17 = vector.broadcast %16 : vector<1x128xf32> to vector<16x128xf32>
    %18 = arith.addf %14, %17 : vector<16x128xf32>
    %c3_17 = arith.constant 3 : index
    %c0_18 = arith.constant 0 : index
    %c0_19 = arith.constant 0 : index
    %19 = vector.load %arg1[%c3_17, %c0_18, %c0_19] : memref<4x16x16xf32, #tpu.memory_space<vmem>>, vector<1x16x16xf32>
    %20 = vector.shape_cast %19 : vector<1x16x16xf32> to vector<16x16xf32>
    %cst_20 = arith.constant dense<0.000000e+00> : vector<16x128xf32>
    %21 = tpu.matmul %20, %18, %cst_20 {dimension_numbers = #tpu.dot_dimension_numbers<[1], [0], [0], [1], [0, 0, 1, 1], [], []>} : vector<16x16xf32>, vector<16x128xf32>, vector<16x128xf32> -> vector<16x128xf32>
    %cst_21 = arith.constant 0.000000e+00 : f32
    %22 = vector.broadcast %cst_21 : f32 to vector<16x128xf32>
    %23 = arith.cmpf oge, %11, %22 : vector<16x128xf32>
    %cst_22 = arith.constant 0.00999999977 : f32
    %24 = vector.broadcast %cst_22 : f32 to vector<16x128xf32>
    %25 = arith.mulf %24, %11 : vector<16x128xf32>
    %26 = arith.select %23, %11, %25 : vector<16x128xi1>, vector<16x128xf32>
    %cst_23 = arith.constant 0.000000e+00 : f32
    %27 = vector.broadcast %cst_23 : f32 to vector<16x128xf32>
    %28 = arith.cmpf oge, %21, %27 : vector<16x128xf32>
    %cst_24 = arith.constant 0.00999999977 : f32
    %29 = vector.broadcast %cst_24 : f32 to vector<16x128xf32>
    %30 = arith.mulf %29, %21 : vector<16x128xf32>
    %31 = arith.select %28, %21, %30 : vector<16x128xi1>, vector<16x128xf32>
    %c0_25 = arith.constant 0 : index
    %c0_26 = arith.constant 0 : index
    %c0_27 = arith.constant 0 : index
    %32 = vector.load %arg4[%c0_25, %c0_26, %c0_27] : memref<4x128x128xf32, #tpu.memory_space<vmem>>, vector<1x128x128xf32>
    %33 = vector.shape_cast %32 : vector<1x128x128xf32> to vector<128x128xf32>
    %cst_28 = arith.constant dense<0.000000e+00> : vector<16x128xf32>
    %34 = tpu.matmul %26, %33, %cst_28 {dimension_numbers = #tpu.dot_dimension_numbers<[1], [0], [0], [1], [0, 0, 1, 1], [], []>} : vector<16x128xf32>, vector<128x128xf32>, vector<16x128xf32> -> vector<16x128xf32>
    %c0_29 = arith.constant 0 : index
    %c0_30 = arith.constant 0 : index
    %c0_31 = arith.constant 0 : index
    %35 = vector.load %arg5[%c0_29, %c0_30, %c0_31] : memref<4x1x128xf32, #tpu.memory_space<vmem>>, vector<1x1x128xf32>
    %36 = vector.shape_cast %35 : vector<1x1x128xf32> to vector<1x128xf32>
    %37 = vector.broadcast %36 : vector<1x128xf32> to vector<16x128xf32>
    %38 = arith.addf %34, %37 : vector<16x128xf32>
    %c0_32 = arith.constant 0 : index
    %c0_33 = arith.constant 0 : index
    %c0_34 = arith.constant 0 : index
    %39 = vector.load %arg1[%c0_32, %c0_33, %c0_34] : memref<4x16x16xf32, #tpu.memory_space<vmem>>, vector<1x16x16xf32>
    %40 = vector.shape_cast %39 : vector<1x16x16xf32> to vector<16x16xf32>
    %cst_35 = arith.constant dense<0.000000e+00> : vector<16x128xf32>
    %41 = tpu.matmul %40, %38, %cst_35 {dimension_numbers = #tpu.dot_dimension_numbers<[1], [0], [0], [1], [0, 0, 1, 1], [], []>} : vector<16x16xf32>, vector<16x128xf32>, vector<16x128xf32> -> vector<16x128xf32>
    %c1 = arith.constant 1 : index
    %c0_36 = arith.constant 0 : index
    %c0_37 = arith.constant 0 : index
    %42 = vector.load %arg4[%c1, %c0_36, %c0_37] : memref<4x128x128xf32, #tpu.memory_space<vmem>>, vector<1x128x128xf32>
    %43 = vector.shape_cast %42 : vector<1x128x128xf32> to vector<128x128xf32>
    %cst_38 = arith.constant dense<0.000000e+00> : vector<16x128xf32>
    %44 = tpu.matmul %31, %43, %cst_38 {dimension_numbers = #tpu.dot_dimension_numbers<[1], [0], [0], [1], [0, 0, 1, 1], [], []>} : vector<16x128xf32>, vector<128x128xf32>, vector<16x128xf32> -> vector<16x128xf32>
    %c1_39 = arith.constant 1 : index
    %c0_40 = arith.constant 0 : index
    %c0_41 = arith.constant 0 : index
    %45 = vector.load %arg5[%c1_39, %c0_40, %c0_41] : memref<4x1x128xf32, #tpu.memory_space<vmem>>, vector<1x1x128xf32>
    %46 = vector.shape_cast %45 : vector<1x1x128xf32> to vector<1x128xf32>
    %47 = vector.broadcast %46 : vector<1x128xf32> to vector<16x128xf32>
    %48 = arith.addf %44, %47 : vector<16x128xf32>
    %c1_42 = arith.constant 1 : index
    %c0_43 = arith.constant 0 : index
    %c0_44 = arith.constant 0 : index
    %49 = vector.load %arg1[%c1_42, %c0_43, %c0_44] : memref<4x16x16xf32, #tpu.memory_space<vmem>>, vector<1x16x16xf32>
    %50 = vector.shape_cast %49 : vector<1x16x16xf32> to vector<16x16xf32>
    %cst_45 = arith.constant dense<0.000000e+00> : vector<16x128xf32>
    %51 = tpu.matmul %50, %48, %cst_45 {dimension_numbers = #tpu.dot_dimension_numbers<[1], [0], [0], [1], [0, 0, 1, 1], [], []>} : vector<16x16xf32>, vector<16x128xf32>, vector<16x128xf32> -> vector<16x128xf32>
    %52 = arith.addf %41, %51 : vector<16x128xf32>
    %c0_46 = arith.constant 0 : index
    %c0_47 = arith.constant 0 : index
    %53 = vector.load %arg6[%c0_46, %c0_47] : memref<128x128xf32, #tpu.memory_space<vmem>>, vector<128x128xf32>
    %cst_48 = arith.constant dense<0.000000e+00> : vector<16x128xf32>
    %54 = tpu.matmul %52, %53, %cst_48 {dimension_numbers = #tpu.dot_dimension_numbers<[1], [0], [0], [1], [0, 0, 1, 1], [], []>} : vector<16x128xf32>, vector<128x128xf32>, vector<16x128xf32> -> vector<16x128xf32>
    %c0_49 = arith.constant 0 : index
    %c0_50 = arith.constant 0 : index
    %55 = vector.load %arg7[%c0_49, %c0_50] : memref<1x128xf32, #tpu.memory_space<vmem>>, vector<1x128xf32>
    %56 = vector.broadcast %55 : vector<1x128xf32> to vector<16x128xf32>
    %57 = arith.addf %54, %56 : vector<16x128xf32>
    %c0_51 = arith.constant 0 : index
    %c0_52 = arith.constant 0 : index
    %58 = vector.load %arg8[%c0_51, %c0_52] : memref<16x128xf32, #tpu.memory_space<vmem>>, vector<16x128xf32>
    tpu.vector_store %arg8[%c0_51, %c0_52], %57 {strides = array<i32>} : memref<16x128xf32, #tpu.memory_space<vmem>>, vector<16x128xf32>,
    return
  }
}

</mosaic_0001>

<llo_original>
// kernel: hetero_rgcn_forward.1
$region0: #{hetero_rgcn_forward.1}
  #allocation0 [shape = 'u32[]', space=smem, size = 0x4, offset = 0x4, fixed_abs, tag = 'smem constant byte address 0x4 - core index']
  #allocation1 [shape = 'u32[144,128]{1,0:T(1,128)}', space=vmem, size = 0x12000, scoped, tag = 'internal scratch']
  %s0 = inlined_call_operand.vmem [shape: f32[3,16,128], index: 0, kind: input, shape index: {}]
  %s1 = inlined_call_operand.vmem [shape: f32[4,16,16], index: 1, kind: input, shape index: {}]
  %s2 = inlined_call_operand.vmem [shape: f32[4,128,128], index: 2, kind: input, shape index: {}]
  %s3 = inlined_call_operand.vmem [shape: f32[4,1,128], index: 3, kind: input, shape index: {}]
  %s4 = inlined_call_operand.vmem [shape: f32[4,128,128], index: 4, kind: input, shape index: {}]
  %s5 = inlined_call_operand.vmem [shape: f32[4,1,128], index: 5, kind: input, shape index: {}]
  %s6 = inlined_call_operand.vmem [shape: f32[128,128], index: 6, kind: input, shape index: {}]
  %s7 = inlined_call_operand.vmem [shape: f32[1,128], index: 7, kind: input, shape index: {}]
  %s8 = inlined_call_operand.vmem [shape: f32[16,128], index: 8, kind: output, shape index: {}]
  %s9 = sld [smem:[#allocation0]]
  $region42: #{hetero_rgcn_forward.1} parent=0
    _
  %s11 = ssub.s32 1, %s9
  %s12 = scalar_select 0, %s11, %s9
  // Predicated region
  $region2: #{hetero_rgcn_forward.1} parent=0 // pred_check
    _
  $region3: #{hetero_rgcn_forward.1} parent=0 // pred_check_branch
    %14 = sbr.rel (0) target = $region5
  $region4: #{hetero_rgcn_forward.1} parent=0 // pred_region
    _
  $region5: #{hetero_rgcn_forward.1} parent=0 // pred_fallthru
    _
  // Predicated region
  $region6: #{hetero_rgcn_forward.1} parent=0 // pred_check
    _
  $region7: #{hetero_rgcn_forward.1} parent=0 // pred_check_branch
    %16 = sbr.rel (0) target = $region9
  $region8: #{hetero_rgcn_forward.1} parent=0 // pred_region
    _
  $region9: #{hetero_rgcn_forward.1} parent=0 // pred_fallthru
    _
  // Predicated region
  $region10: #{hetero_rgcn_forward.1} parent=0 // pred_check
    _
  $region11: #{hetero_rgcn_forward.1} parent=0 // pred_check_branch
    %18 = sbr.rel (0) target = $region13
  $region12: #{hetero_rgcn_forward.1} parent=0 // pred_region
    _
  $region13: #{hetero_rgcn_forward.1} parent=0 // pred_fallthru
    _
  // Predicated region
  $region14: #{hetero_rgcn_forward.1} parent=0 // pred_check
    _
  $region15: #{hetero_rgcn_forward.1} parent=0 // pred_check_branch
    %20 = sbr.rel (0) target = $region17
  $region16: #{hetero_rgcn_forward.1} parent=0 // pred_region
    _
  $region17: #{hetero_rgcn_forward.1} parent=0 // pred_fallthru
    _
  // Predicated region
  $region18: #{hetero_rgcn_forward.1} parent=0 // pred_check
    _
  $region19: #{hetero_rgcn_forward.1} parent=0 // pred_check_branch
    %22 = sbr.rel (0) target = $region21
  $region20: #{hetero_rgcn_forward.1} parent=0 // pred_region
    _
  $region21: #{hetero_rgcn_forward.1} parent=0 // pred_fallthru
    _
  // Predicated region
  $region22: #{hetero_rgcn_forward.1} parent=0 // pred_check
    _
  $region23: #{hetero_rgcn_forward.1} parent=0 // pred_check_branch
    %24 = sbr.rel (0) target = $region25
  $region24: #{hetero_rgcn_forward.1} parent=0 // pred_region
    _
  $region25: #{hetero_rgcn_forward.1} parent=0 // pred_fallthru
    _
  // Predicated region
  $region26: #{hetero_rgcn_forward.1} parent=0 // pred_check
    _
  $region27: #{hetero_rgcn_forward.1} parent=0 // pred_check_branch
    %26 = sbr.rel (0) target = $region29
  $region28: #{hetero_rgcn_forward.1} parent=0 // pred_region
    _
  $region29: #{hetero_rgcn_forward.1} parent=0 // pred_fallthru
    _
  // Predicated region
  $region30: #{hetero_rgcn_forward.1} parent=0 // pred_check
    _
  $region31: #{hetero_rgcn_forward.1} parent=0 // pred_check_branch
    %28 = sbr.rel (0) target = $region33
  $region32: #{hetero_rgcn_forward.1} parent=0 // pred_region
    _
  $region33: #{hetero_rgcn_forward.1} parent=0 // pred_fallthru
    _
  %v29 = vld [vmem:[%s0] sm:$0xff]
  %v30 = vld [vmem:[%s0 + $0x8] sm:$0xff]
  %s31 = scalar_lea.vmem %s2, 256
  %v32 = vld [vmem:[%s31] sm:$0xff]
  %v33 = vld [vmem:[%s31 + $0x8] sm:$0xff]
  %v34 = vld [vmem:[%s31 + $0x10] sm:$0xff]
  %v35 = vld [vmem:[%s31 + $0x18] sm:$0xff]
  %v36 = vld [vmem:[%s31 + $0x20] sm:$0xff]
  %v37 = vld [vmem:[%s31 + $0x28] sm:$0xff]
  %v38 = vld [vmem:[%s31 + $0x30] sm:$0xff]
  %v39 = vld [vmem:[%s31 + $0x38] sm:$0xff]
  %v40 = vld [vmem:[%s31 + $0x40] sm:$0xff]
  %v41 = vld [vmem:[%s31 + $0x48] sm:$0xff]
  %v42 = vld [vmem:[%s31 + $0x50] sm:$0xff]
  %v43 = vld [vmem:[%s31 + $0x58] sm:$0xff]
  %v44 = vld [vmem:[%s31 + $0x60] sm:$0xff]
  %v45 = vld [vmem:[%s31 + $0x68] sm:$0xff]
  %v46 = vld [vmem:[%s31 + $0x70] sm:$0xff]
  %v47 = vld [vmem:[%s31 + $0x78] sm:$0xff]
  %s48 = scalar_lea.vmem %s3, 2
  %v49 = vld [vmem:[%s48] sm:$0x1]
  %v51 = vlaneseq
  %v52 = vshrl.u32 %v51, 7
  %v53 = vsub.s32 0, %v52
  %v54 = vrot.slane %v49, %v53
  %56 = vmatprep.subr.mxu0 0.0
  %57 = vmatpush1.msra.mxu0 %v47
  %58 = vmatprep.subr.mxu0 0.0
  %59 = vmatpush1.msra.mxu0 %v46
  %60 = vmatprep.subr.mxu0 0.0
  %61 = vmatpush1.msra.mxu0 %v45
  %62 = vmatprep.subr.mxu0 0.0
  %63 = vmatpush1.msra.mxu0 %v44
  %64 = vmatprep.subr.mxu0 0.0
  %65 = vmatpush1.msra.mxu0 %v43
  %66 = vmatprep.subr.mxu0 0.0
  %67 = vmatpush1.msra.mxu0 %v42
  %68 = vmatprep.subr.mxu0 0.0
  %69 = vmatpush1.msra.mxu0 %v41
  %70 = vmatprep.subr.mxu0 0.0
  %71 = vmatpush1.msra.mxu0 %v40
  %72 = vmatprep.subr.mxu0 0.0
  %73 = vmatpush1.msra.mxu0 %v39
  %74 = vmatprep.subr.mxu0 0.0
  %75 = vmatpush1.msra.mxu0 %v38
  %76 = vmatprep.subr.mxu0 0.0
  %77 = vmatpush1.msra.mxu0 %v37
  %78 = vmatprep.subr.mxu0 0.0
  %79 = vmatpush1.msra.mxu0 %v36
  %80 = vmatprep.subr.mxu0 0.0
  %81 = vmatpush1.msra.mxu0 %v35
  %82 = vmatprep.subr.mxu0 0.0
  %83 = vmatpush1.msra.mxu0 %v34
  %84 = vmatprep.subr.mxu0 0.0
  %85 = vmatpush1.msra.mxu0 %v33
  %86 = vmatprep.subr.mxu0 0.0
  %87 = vmatpush1.msra.mxu0 %v32
  %88 = vmatprep.subr.mxu0 0.0
  %89 = vmatpush2.msra.mxu0 0.0
  %90 = vmatprep.subr.mxu0 0.0
  %91 = vmatpush2.msra.mxu0 0.0
  %92 = vmatprep.subr.mxu0 0.0
  %93 = vmatpush2.msra.mxu0 0.0
  %94 = vmatprep.subr.mxu0 0.0
  %95 = vmatpush2.msra.mxu0 0.0
  %96 = vmatprep.subr.mxu0 0.0
  %97 = vmatpush2.msra.mxu0 0.0
  %98 = vmatprep.subr.mxu0 0.0
  %99 = vmatpush2.msra.mxu0 0.0
  %100 = vmatprep.subr.mxu0 0.0
  %101 = vmatpush2.msra.mxu0 0.0
  %102 = vmatprep.subr.mxu0 0.0
  %103 = vmatpush2.msra.mxu0 0.0
  %104 = vmatprep.subr.mxu0 0.0
  %105 = vmatpush2.msra.mxu0 0.0
  %106 = vmatprep.subr.mxu0 0.0
  %107 = vmatpush2.msra.mxu0 0.0
  %108 = vmatprep.subr.mxu0 0.0
  %109 = vmatpush2.msra.mxu0 0.0
  %110 = vmatprep.subr.mxu0 0.0
  %111 = vmatpush2.msra.mxu0 0.0
  %112 = vmatprep.subr.mxu0 0.0
  %113 = vmatpush2.msra.mxu0 0.0
  %114 = vmatprep.subr.mxu0 0.0
  %115 = vmatpush2.msra.mxu0 0.0
  %116 = vmatprep.subr.mxu0 0.0
  %117 = vmatpush2.msra.mxu0 0.0
  %118 = vmatprep.subr.mxu0 0.0
  %119 = vmatpush2.msra.mxu0 0.0
  %120 = vmatprep.mubr.f32.mxu0 0.0
  %121 = vmatmul.mubr.f32.gmra.mxu0 %v29
  %v122 = vpop.f32.mrf.mxu0
  %v123 = vadd.f32 %v54, %v122
  %v124 = vpop.f32.mrf.mxu0
  %125 = vmatprep.mubr.f32.mxu0 0.0
  %126 = vmatmul.mubr.f32.gmra.mxu0 %v30
  %v127 = vpop.f32.mrf.mxu0
  %v128 = vadd.f32 %v54, %v127
  %v129 = vpop.f32.mrf.mxu0
  %130 = vdwg.mxu0
  %s131 = scalar_lea.vmem %s1, 32
  %v132 = vld [vmem:[%s131] sm:$0xff]
  %v133 = vld [vmem:[%s131 + $0x8] sm:$0xff]
  %vm134 = vcmask 130048
  %v136 = vsel %vm134, %v132, 0
  %v139 = vsel %vm134, %v133, 0
  %141 = vmatprep.subr.mxu0 0.0
  %142 = vmatpush1.msra.mxu0 0.0
  %143 = vmatprep.subr.mxu0 0.0
  %144 = vmatpush1.msra.mxu0 0.0
  %145 = vmatprep.subr.mxu0 0.0
  %146 = vmatpush1.msra.mxu0 0.0
  %147 = vmatprep.subr.mxu0 0.0
  %148 = vmatpush1.msra.mxu0 0.0
  %149 = vmatprep.subr.mxu0 0.0
  %150 = vmatpush1.msra.mxu0 0.0
  %151 = vmatprep.subr.mxu0 0.0
  %152 = vmatpush1.msra.mxu0 0.0
  %153 = vmatprep.subr.mxu0 0.0
  %154 = vmatpush1.msra.mxu0 0.0
  %155 = vmatprep.subr.mxu0 0.0
  %156 = vmatpush1.msra.mxu0 0.0
  %157 = vmatprep.subr.mxu0 0.0
  %158 = vmatpush1.msra.mxu0 0.0
  %159 = vmatprep.subr.mxu0 0.0
  %160 = vmatpush1.msra.mxu0 0.0
  %161 = vmatprep.subr.mxu0 0.0
  %162 = vmatpush1.msra.mxu0 0.0
  %163 = vmatprep.subr.mxu0 0.0
  %164 = vmatpush1.msra.mxu0 0.0
  %165 = vmatprep.subr.mxu0 0.0
  %166 = vmatpush1.msra.mxu0 0.0
  %167 = vmatprep.subr.mxu0 0.0
  %168 = vmatpush1.msra.mxu0 0.0
  %169 = vmatprep.subr.mxu0 0.0
  %170 = vmatpush1.msra.mxu0 %v128
  %171 = vmatprep.subr.mxu0 0.0
  %172 = vmatpush1.msra.mxu0 %v123
  %173 = vmatprep.subr.mxu0 0.0
  %174 = vmatpush2.msra.mxu0 0.0
  %175 = vmatprep.subr.mxu0 0.0
  %176 = vmatpush2.msra.mxu0 0.0
  %177 = vmatprep.subr.mxu0 0.0
  %178 = vmatpush2.msra.mxu0 0.0
  %179 = vmatprep.subr.mxu0 0.0
  %180 = vmatpush2.msra.mxu0 0.0
  %181 = vmatprep.subr.mxu0 0.0
  %182 = vmatpush2.msra.mxu0 0.0
  %183 = vmatprep.subr.mxu0 0.0
  %184 = vmatpush2.msra.mxu0 0.0
  %185 = vmatprep.subr.mxu0 0.0
  %186 = vmatpush2.msra.mxu0 0.0
  %187 = vmatprep.subr.mxu0 0.0
  %188 = vmatpush2.msra.mxu0 0.0
  %189 = vmatprep.subr.mxu0 0.0
  %190 = vmatpush2.msra.mxu0 0.0
  %191 = vmatprep.subr.mxu0 0.0
  %192 = vmatpush2.msra.mxu0 0.0
  %193 = vmatprep.subr.mxu0 0.0
  %194 = vmatpush2.msra.mxu0 0.0
  %195 = vmatprep.subr.mxu0 0.0
  %196 = vmatpush2.msra.mxu0 0.0
  %197 = vmatprep.subr.mxu0 0.0
  %198 = vmatpush2.msra.mxu0 0.0
  %199 = vmatprep.subr.mxu0 0.0
  %200 = vmatpush2.msra.mxu0 0.0
  %201 = vmatprep.subr.mxu0 0.0
  %202 = vmatpush2.msra.mxu0 0.0
  %203 = vmatprep.subr.mxu0 0.0
  %204 = vmatpush2.msra.mxu0 0.0
  %205 = vmatprep.mubr.f32.mxu0 0.0
  %206 = vmatmul.mubr.f32.gmra.mxu0 %v136
  %v207 = vpop.f32.mrf.mxu0
  %v208 = vadd.f32 0.0, %v207
  %v209 = vpop.f32.mrf.mxu0
  %210 = vmatprep.mubr.f32.mxu0 0.0
  %211 = vmatmul.mubr.f32.gmra.mxu0 %v139
  %v212 = vpop.f32.mrf.mxu0
  %v213 = vadd.f32 0.0, %v212
  %v214 = vpop.f32.mrf.mxu0
  %215 = vdwg.mxu0
  %s216 = scalar_lea.vmem %s2, 384
  %v217 = vld [vmem:[%s216] sm:$0xff]
  %v218 = vld [vmem:[%s216 + $0x8] sm:$0xff]
  %v219 = vld [vmem:[%s216 + $0x10] sm:$0xff]
  %v220 = vld [vmem:[%s216 + $0x18] sm:$0xff]
  %v221 = vld [vmem:[%s216 + $0x20] sm:$0xff]
  %v222 = vld [vmem:[%s216 + $0x28] sm:$0xff]
  %v223 = vld [vmem:[%s216 + $0x30] sm:$0xff]
  %v224 = vld [vmem:[%s216 + $0x38] sm:$0xff]
  %v225 = vld [vmem:[%s216 + $0x40] sm:$0xff]
  %v226 = vld [vmem:[%s216 + $0x48] sm:$0xff]
  %v227 = vld [vmem:[%s216 + $0x50] sm:$0xff]
  %v228 = vld [vmem:[%s216 + $0x58] sm:$0xff]
  %v229 = vld [vmem:[%s216 + $0x60] sm:$0xff]
  %v230 = vld [vmem:[%s216 + $0x68] sm:$0xff]
  %v231 = vld [vmem:[%s216 + $0x70] sm:$0xff]
  %v232 = vld [vmem:[%s216 + $0x78] sm:$0xff]
  %s233 = scalar_lea.vmem %s3, 3
  %v234 = vld [vmem:[%s233] sm:$0x1]
  %v236 = vlaneseq
  %v237 = vshrl.u32 %v236, 7
  %v238 = vsub.s32 0, %v237
  %v239 = vrot.slane %v234, %v238
  %241 = vmatprep.subr.mxu0 0.0
  %242 = vmatpush1.msra.mxu0 %v232
  %243 = vmatprep.subr.mxu0 0.0
  %244 = vmatpush1.msra.mxu0 %v231
  %245 = vmatprep.subr.mxu0 0.0
  %246 = vmatpush1.msra.mxu0 %v230
  %247 = vmatprep.subr.mxu0 0.0
  %248 = vmatpush1.msra.mxu0 %v229
  %249 = vmatprep.subr.mxu0 0.0
  %250 = vmatpush1.msra.mxu0 %v228
  %251 = vmatprep.subr.mxu0 0.0
  %252 = vmatpush1.msra.mxu0 %v227
  %253 = vmatprep.subr.mxu0 0.0
  %254 = vmatpush1.msra.mxu0 %v226
  %255 = vmatprep.subr.mxu0 0.0
  %256 = vmatpush1.msra.mxu0 %v225
  %257 = vmatprep.subr.mxu0 0.0
  %258 = vmatpush1.msra.mxu0 %v224
  %259 = vmatprep.subr.mxu0 0.0
  %260 = vmatpush1.msra.mxu0 %v223
  %261 = vmatprep.subr.mxu0 0.0
  %262 = vmatpush1.msra.mxu0 %v222
  %263 = vmatprep.subr.mxu0 0.0
  %264 = vmatpush1.msra.mxu0 %v221
  %265 = vmatprep.subr.mxu0 0.0
  %266 = vmatpush1.msra.mxu0 %v220
  %267 = vmatprep.subr.mxu0 0.0
  %268 = vmatpush1.msra.mxu0 %v219
  %269 = vmatprep.subr.mxu0 0.0
  %270 = vmatpush1.msra.mxu0 %v218
  %271 = vmatprep.subr.mxu0 0.0
  %272 = vmatpush1.msra.mxu0 %v217
  %273 = vmatprep.subr.mxu0 0.0
  %274 = vmatpush2.msra.mxu0 0.0
  %275 = vmatprep.subr.mxu0 0.0
  %276 = vmatpush2.msra.mxu0 0.0
  %277 = vmatprep.subr.mxu0 0.0
  %278 = vmatpush2.msra.mxu0 0.0
  %279 = vmatprep.subr.mxu0 0.0
  %280 = vmatpush2.msra.mxu0 0.0
  %281 = vmatprep.subr.mxu0 0.0
  %282 = vmatpush2.msra.mxu0 0.0
  %283 = vmatprep.subr.mxu0 0.0
  %284 = vmatpush2.msra.mxu0 0.0
  %285 = vmatprep.subr.mxu0 0.0
  %286 = vmatpush2.msra.mxu0 0.0
  %287 = vmatprep.subr.mxu0 0.0
  %288 = vmatpush2.msra.mxu0 0.0
  %289 = vmatprep.subr.mxu0 0.0
  %290 = vmatpush2.msra.mxu0 0.0
  %291 = vmatprep.subr.mxu0 0.0
  %292 = vmatpush2.msra.mxu0 0.0
  %293 = vmatprep.subr.mxu0 0.0
  %294 = vmatpush2.msra.mxu0 0.0
  %295 = vmatprep.subr.mxu0 0.0
  %296 = vmatpush2.msra.mxu0 0.0
  %297 = vmatprep.subr.mxu0 0.0
  %298 = vmatpush2.msra.mxu0 0.0
  %299 = vmatprep.subr.mxu0 0.0
  %300 = vmatpush2.msra.mxu0 0.0
  %301 = vmatprep.subr.mxu0 0.0
  %302 = vmatpush2.msra.mxu0 0.0
  %303 = vmatprep.subr.mxu0 0.0
  %304 = vmatpush2.msra.mxu0 0.0
  %305 = vmatprep.mubr.f32.mxu0 0.0
  %306 = vmatmul.mubr.f32.gmra.mxu0 %v29
  %v307 = vpop.f32.mrf.mxu0
  %v308 = vadd.f32 %v239, %v307
  %v309 = vpop.f32.mrf.mxu0
  %310 = vmatprep.mubr.f32.mxu0 0.0
  %311 = vmatmul.mubr.f32.gmra.mxu0 %v30
  %v312 = vpop.f32.mrf.mxu0
  %v313 = vadd.f32 %v239, %v312
  %v314 = vpop.f32.mrf.mxu0
  %315 = vdwg.mxu0
  %s316 = scalar_lea.vmem %s1, 48
  %v317 = vld [vmem:[%s316] sm:$0xff]
  %v318 = vld [vmem:[%s316 + $0x8] sm:$0xff]
  %v320 = vsel %vm134, %v317, 0
  %v323 = vsel %vm134, %v318, 0
  %325 = vmatprep.subr.mxu0 0.0
  %326 = vmatpush1.msra.mxu0 0.0
  %327 = vmatprep.subr.mxu0 0.0
  %328 = vmatpush1.msra.mxu0 0.0
  %329 = vmatprep.subr.mxu0 0.0
  %330 = vmatpush1.msra.mxu0 0.0
  %331 = vmatprep.subr.mxu0 0.0
  %332 = vmatpush1.msra.mxu0 0.0
  %333 = vmatprep.subr.mxu0 0.0
  %334 = vmatpush1.msra.mxu0 0.0
  %335 = vmatprep.subr.mxu0 0.0
  %336 = vmatpush1.msra.mxu0 0.0
  %337 = vmatprep.subr.mxu0 0.0
  %338 = vmatpush1.msra.mxu0 0.0
  %339 = vmatprep.subr.mxu0 0.0
  %340 = vmatpush1.msra.mxu0 0.0
  %341 = vmatprep.subr.mxu0 0.0
  %342 = vmatpush1.msra.mxu0 0.0
  %343 = vmatprep.subr.mxu0 0.0
  %344 = vmatpush1.msra.mxu0 0.0
  %345 = vmatprep.subr.mxu0 0.0
  %346 = vmatpush1.msra.mxu0 0.0
  %347 = vmatprep.subr.mxu0 0.0
  %348 = vmatpush1.msra.mxu0 0.0
  %349 = vmatprep.subr.mxu0 0.0
  %350 = vmatpush1.msra.mxu0 0.0
  %351 = vmatprep.subr.mxu0 0.0
  %352 = vmatpush1.msra.mxu0 0.0
  %353 = vmatprep.subr.mxu0 0.0
  %354 = vmatpush1.msra.mxu0 %v313
  %355 = vmatprep.subr.mxu0 0.0
  %356 = vmatpush1.msra.mxu0 %v308
  %357 = vmatprep.subr.mxu0 0.0
  %358 = vmatpush2.msra.mxu0 0.0
  %359 = vmatprep.subr.mxu0 0.0
  %360 = vmatpush2.msra.mxu0 0.0
  %361 = vmatprep.subr.mxu0 0.0
  %362 = vmatpush2.msra.mxu0 0.0
  %363 = vmatprep.subr.mxu0 0.0
  %364 = vmatpush2.msra.mxu0 0.0
  %365 = vmatprep.subr.mxu0 0.0
  %366 = vmatpush2.msra.mxu0 0.0
  %367 = vmatprep.subr.mxu0 0.0
  %368 = vmatpush2.msra.mxu0 0.0
  %369 = vmatprep.subr.mxu0 0.0
  %370 = vmatpush2.msra.mxu0 0.0
  %371 = vmatprep.subr.mxu0 0.0
  %372 = vmatpush2.msra.mxu0 0.0
  %373 = vmatprep.subr.mxu0 0.0
  %374 = vmatpush2.msra.mxu0 0.0
  %375 = vmatprep.subr.mxu0 0.0
  %376 = vmatpush2.msra.mxu0 0.0
  %377 = vmatprep.subr.mxu0 0.0
  %378 = vmatpush2.msra.mxu0 0.0
  %379 = vmatprep.subr.mxu0 0.0
  %380 = vmatpush2.msra.mxu0 0.0
  %381 = vmatprep.subr.mxu0 0.0
  %382 = vmatpush2.msra.mxu0 0.0
  %383 = vmatprep.subr.mxu0 0.0
  %384 = vmatpush2.msra.mxu0 0.0
  %385 = vmatprep.subr.mxu0 0.0
  %386 = vmatpush2.msra.mxu0 0.0
  %387 = vmatprep.subr.mxu0 0.0
  %388 = vmatpush2.msra.mxu0 0.0
  %389 = vmatprep.mubr.f32.mxu0 0.0
  %390 = vmatmul.mubr.f32.gmra.mxu0 %v320
  %v391 = vpop.f32.mrf.mxu0
  %v392 = vadd.f32 0.0, %v391
  %v393 = vpop.f32.mrf.mxu0
  %394 = vmatprep.mubr.f32.mxu0 0.0
  %395 = vmatmul.mubr.f32.gmra.mxu0 %v323
  %v396 = vpop.f32.mrf.mxu0
  %v397 = vadd.f32 0.0, %v396
  %v398 = vpop.f32.mrf.mxu0
  %399 = vdwg.mxu0
  %vm400 = vcmp.ge.f32.partialorder %v208, 0.0
  %vm401 = vcmp.ge.f32.partialorder %v213, 0.0
  %v402 = vmul.f32 %v208, 0.01
  %v403 = vmul.f32 %v213, 0.01
  %v404 = vsel %vm400, %v208, %v402
  %v405 = vsel %vm401, %v213, %v403
  %vm406 = vcmp.ge.f32.partialorder %v392, 0.0
  %vm407 = vcmp.ge.f32.partialorder %v397, 0.0
  %v408 = vmul.f32 %v392, 0.01
  %v409 = vmul.f32 %v397, 0.01
  %v410 = vsel %vm406, %v392, %v408
  %v411 = vsel %vm407, %v397, %v409
  %v412 = vld [vmem:[%s4] sm:$0xff]
  %v413 = vld [vmem:[%s4 + $0x8] sm:$0xff]
  %v414 = vld [vmem:[%s4 + $0x10] sm:$0xff]
  %v415 = vld [vmem:[%s4 + $0x18] sm:$0xff]
  %v416 = vld [vmem:[%s4 + $0x20] sm:$0xff]
  %v417 = vld [vmem:[%s4 + $0x28] sm:$0xff]
  %v418 = vld [vmem:[%s4 + $0x30] sm:$0xff]
  %v419 = vld [vmem:[%s4 + $0x38] sm:$0xff]
  %v420 = vld [vmem:[%s4 + $0x40] sm:$0xff]
  %v421 = vld [vmem:[%s4 + $0x48] sm:$0xff]
  %v422 = vld [vmem:[%s4 + $0x50] sm:$0xff]
  %v423 = vld [vmem:[%s4 + $0x58] sm:$0xff]
  %v424 = vld [vmem:[%s4 + $0x60] sm:$0xff]
  %v425 = vld [vmem:[%s4 + $0x68] sm:$0xff]
  %v426 = vld [vmem:[%s4 + $0x70] sm:$0xff]
  %v427 = vld [vmem:[%s4 + $0x78] sm:$0xff]
  %v428 = vld [vmem:[%s5] sm:$0x1]
  %v430 = vlaneseq
  %v431 = vshrl.u32 %v430, 7
  %v432 = vsub.s32 0, %v431
  %v433 = vrot.slane %v428, %v432
  %435 = vmatprep.subr.mxu0 0.0
  %436 = vmatpush1.msra.mxu0 %v427
  %437 = vmatprep.subr.mxu0 0.0
  %438 = vmatpush1.msra.mxu0 %v426
  %439 = vmatprep.subr.mxu0 0.0
  %440 = vmatpush1.msra.mxu0 %v425
  %441 = vmatprep.subr.mxu0 0.0
  %442 = vmatpush1.msra.mxu0 %v424
  %443 = vmatprep.subr.mxu0 0.0
  %444 = vmatpush1.msra.mxu0 %v423
  %445 = vmatprep.subr.mxu0 0.0
  %446 = vmatpush1.msra.mxu0 %v422
  %447 = vmatprep.subr.mxu0 0.0
  %448 = vmatpush1.msra.mxu0 %v421
  %449 = vmatprep.subr.mxu0 0.0
  %450 = vmatpush1.msra.mxu0 %v420
  %451 = vmatprep.subr.mxu0 0.0
  %452 = vmatpush1.msra.mxu0 %v419
  %453 = vmatprep.subr.mxu0 0.0
  %454 = vmatpush1.msra.mxu0 %v418
  %455 = vmatprep.subr.mxu0 0.0
  %456 = vmatpush1.msra.mxu0 %v417
  %457 = vmatprep.subr.mxu0 0.0
  %458 = vmatpush1.msra.mxu0 %v416
  %459 = vmatprep.subr.mxu0 0.0
  %460 = vmatpush1.msra.mxu0 %v415
  %461 = vmatprep.subr.mxu0 0.0
  %462 = vmatpush1.msra.mxu0 %v414
  %463 = vmatprep.subr.mxu0 0.0
  %464 = vmatpush1.msra.mxu0 %v413
  %465 = vmatprep.subr.mxu0 0.0
  %466 = vmatpush1.msra.mxu0 %v412
  %467 = vmatprep.subr.mxu0 0.0
  %468 = vmatpush2.msra.mxu0 0.0
  %469 = vmatprep.subr.mxu0 0.0
  %470 = vmatpush2.msra.mxu0 0.0
  %471 = vmatprep.subr.mxu0 0.0
  %472 = vmatpush2.msra.mxu0 0.0
  %473 = vmatprep.subr.mxu0 0.0
  %474 = vmatpush2.msra.mxu0 0.0
  %475 = vmatprep.subr.mxu0 0.0
  %476 = vmatpush2.msra.mxu0 0.0
  %477 = vmatprep.subr.mxu0 0.0
  %478 = vmatpush2.msra.mxu0 0.0
  %479 = vmatprep.subr.mxu0 0.0
  %480 = vmatpush2.msra.mxu0 0.0
  %481 = vmatprep.subr.mxu0 0.0
  %482 = vmatpush2.msra.mxu0 0.0
  %483 = vmatprep.subr.mxu0 0.0
  %484 = vmatpush2.msra.mxu0 0.0
  %485 = vmatprep.subr.mxu0 0.0
  %486 = vmatpush2.msra.mxu0 0.0
  %487 = vmatprep.subr.mxu0 0.0
  %488 = vmatpush2.msra.mxu0 0.0
  %489 = vmatprep.subr.mxu0 0.0
  %490 = vmatpush2.msra.mxu0 0.0
  %491 = vmatprep.subr.mxu0 0.0
  %492 = vmatpush2.msra.mxu0 0.0
  %493 = vmatprep.subr.mxu0 0.0
  %494 = vmatpush2.msra.mxu0 0.0
  %495 = vmatprep.subr.mxu0 0.0
  %496 = vmatpush2.msra.mxu0 0.0
  %497 = vmatprep.subr.mxu0 0.0
  %498 = vmatpush2.msra.mxu0 0.0
  %499 = vmatprep.mubr.f32.mxu0 0.0
  %500 = vmatmul.mubr.f32.gmra.mxu0 %v404
  %v501 = vpop.f32.mrf.mxu0
  %v502 = vadd.f32 %v433, %v501
  %v503 = vpop.f32.mrf.mxu0
  %504 = vmatprep.mubr.f32.mxu0 0.0
  %505 = vmatmul.mubr.f32.gmra.mxu0 %v405
  %v506 = vpop.f32.mrf.mxu0
  %v507 = vadd.f32 %v433, %v506
  %v508 = vpop.f32.mrf.mxu0
  %509 = vdwg.mxu0
  %v510 = vld [vmem:[%s1] sm:$0xff]
  %v511 = vld [vmem:[%s1 + $0x8] sm:$0xff]
  %s512 = scalar_lea.vmem %s4, 128
  %v513 = vld [vmem:[%s512] sm:$0xff]
  %v514 = vld [vmem:[%s512 + $0x8] sm:$0xff]
  %v515 = vld [vmem:[%s512 + $0x10] sm:$0xff]
  %v516 = vld [vmem:[%s512 + $0x18] sm:$0xff]
  %v517 = vld [vmem:[%s512 + $0x20] sm:$0xff]
  %v518 = vld [vmem:[%s512 + $0x28] sm:$0xff]
  %v519 = vld [vmem:[%s512 + $0x30] sm:$0xff]
  %v520 = vld [vmem:[%s512 + $0x38] sm:$0xff]
  %v521 = vld [vmem:[%s512 + $0x40] sm:$0xff]
  %v522 = vld [vmem:[%s512 + $0x48] sm:$0xff]
  %v523 = vld [vmem:[%s512 + $0x50] sm:$0xff]
  %v524 = vld [vmem:[%s512 + $0x58] sm:$0xff]
  %v525 = vld [vmem:[%s512 + $0x60] sm:$0xff]
  %v526 = vld [vmem:[%s512 + $0x68] sm:$0xff]
  %v527 = vld [vmem:[%s512 + $0x70] sm:$0xff]
  %v528 = vld [vmem:[%s512 + $0x78] sm:$0xff]
  %s529 = scalar_lea.vmem %s5, 1
  %v530 = vld [vmem:[%s529] sm:$0x1]
  %v532 = vlaneseq
  %v533 = vshrl.u32 %v532, 7
  %v534 = vsub.s32 0, %v533
  %v535 = vrot.slane %v530, %v534
  %537 = vmatprep.subr.mxu0 0.0
  %538 = vmatpush1.msra.mxu0 %v528
  %539 = vmatprep.subr.mxu0 0.0
  %540 = vmatpush1.msra.mxu0 %v527
  %541 = vmatprep.subr.mxu0 0.0
  %542 = vmatpush1.msra.mxu0 %v526
  %543 = vmatprep.subr.mxu0 0.0
  %544 = vmatpush1.msra.mxu0 %v525
  %545 = vmatprep.subr.mxu0 0.0
  %546 = vmatpush1.msra.mxu0 %v524
  %547 = vmatprep.subr.mxu0 0.0
  %548 = vmatpush1.msra.mxu0 %v523
  %549 = vmatprep.subr.mxu0 0.0
  %550 = vmatpush1.msra.mxu0 %v522
  %551 = vmatprep.subr.mxu0 0.0
  %552 = vmatpush1.msra.mxu0 %v521
  %553 = vmatprep.subr.mxu0 0.0
  %554 = vmatpush1.msra.mxu0 %v520
  %555 = vmatprep.subr.mxu0 0.0
  %556 = vmatpush1.msra.mxu0 %v519
  %557 = vmatprep.subr.mxu0 0.0
  %558 = vmatpush1.msra.mxu0 %v518
  %559 = vmatprep.subr.mxu0 0.0
  %560 = vmatpush1.msra.mxu0 %v517
  %561 = vmatprep.subr.mxu0 0.0
  %562 = vmatpush1.msra.mxu0 %v516
  %563 = vmatprep.subr.mxu0 0.0
  %564 = vmatpush1.msra.mxu0 %v515
  %565 = vmatprep.subr.mxu0 0.0
  %566 = vmatpush1.msra.mxu0 %v514
  %567 = vmatprep.subr.mxu0 0.0
  %568 = vmatpush1.msra.mxu0 %v513
  %569 = vmatprep.subr.mxu0 0.0
  %570 = vmatpush2.msra.mxu0 0.0
  %571 = vmatprep.subr.mxu0 0.0
  %572 = vmatpush2.msra.mxu0 0.0
  %573 = vmatprep.subr.mxu0 0.0
  %574 = vmatpush2.msra.mxu0 0.0
  %575 = vmatprep.subr.mxu0 0.0
  %576 = vmatpush2.msra.mxu0 0.0
  %577 = vmatprep.subr.mxu0 0.0
  %578 = vmatpush2.msra.mxu0 0.0
  %579 = vmatprep.subr.mxu0 0.0
  %580 = vmatpush2.msra.mxu0 0.0
  %581 = vmatprep.subr.mxu0 0.0
  %582 = vmatpush2.msra.mxu0 0.0
  %583 = vmatprep.subr.mxu0 0.0
  %584 = vmatpush2.msra.mxu0 0.0
  %585 = vmatprep.subr.mxu0 0.0
  %586 = vmatpush2.msra.mxu0 0.0
  %587 = vmatprep.subr.mxu0 0.0
  %588 = vmatpush2.msra.mxu0 0.0
  %589 = vmatprep.subr.mxu0 0.0
  %590 = vmatpush2.msra.mxu0 0.0
  %591 = vmatprep.subr.mxu0 0.0
  %592 = vmatpush2.msra.mxu0 0.0
  %593 = vmatprep.subr.mxu0 0.0
  %594 = vmatpush2.msra.mxu0 0.0
  %595 = vmatprep.subr.mxu0 0.0
  %596 = vmatpush2.msra.mxu0 0.0
  %597 = vmatprep.subr.mxu0 0.0
  %598 = vmatpush2.msra.mxu0 0.0
  %599 = vmatprep.subr.mxu0 0.0
  %600 = vmatpush2.msra.mxu0 0.0
  %601 = vmatprep.mubr.f32.mxu0 0.0
  %602 = vmatmul.mubr.f32.gmra.mxu0 %v410
  %v603 = vpop.f32.mrf.mxu0
  %v604 = vadd.f32 %v535, %v603
  %v605 = vpop.f32.mrf.mxu0
  %606 = vmatprep.mubr.f32.mxu0 0.0
  %607 = vmatmul.mubr.f32.gmra.mxu0 %v411
  %v608 = vpop.f32.mrf.mxu0
  %v609 = vadd.f32 %v535, %v608
  %v610 = vpop.f32.mrf.mxu0
  %611 = vdwg.mxu0
  %s612 = scalar_lea.vmem %s1, 16
  %v613 = vld [vmem:[%s612] sm:$0xff]
  %v614 = vld [vmem:[%s612 + $0x8] sm:$0xff]
  %v616 = vsel %vm134, %v613, 0
  %v619 = vsel %vm134, %v614, 0
  %621 = vmatprep.subr.mxu0 0.0
  %622 = vmatpush1.msra.mxu0 0.0
  %623 = vmatprep.subr.mxu0 0.0
  %624 = vmatpush1.msra.mxu0 0.0
  %625 = vmatprep.subr.mxu0 0.0
  %626 = vmatpush1.msra.mxu0 0.0
  %627 = vmatprep.subr.mxu0 0.0
  %628 = vmatpush1.msra.mxu0 0.0
  %629 = vmatprep.subr.mxu0 0.0
  %630 = vmatpush1.msra.mxu0 0.0
  %631 = vmatprep.subr.mxu0 0.0
  %632 = vmatpush1.msra.mxu0 0.0
  %633 = vmatprep.subr.mxu0 0.0
  %634 = vmatpush1.msra.mxu0 0.0
  %635 = vmatprep.subr.mxu0 0.0
  %636 = vmatpush1.msra.mxu0 0.0
  %637 = vmatprep.subr.mxu0 0.0
  %638 = vmatpush1.msra.mxu0 0.0
  %639 = vmatprep.subr.mxu0 0.0
  %640 = vmatpush1.msra.mxu0 0.0
  %641 = vmatprep.subr.mxu0 0.0
  %642 = vmatpush1.msra.mxu0 0.0
  %643 = vmatprep.subr.mxu0 0.0
  %644 = vmatpush1.msra.mxu0 0.0
  %645 = vmatprep.subr.mxu0 0.0
  %646 = vmatpush1.msra.mxu0 0.0
  %647 = vmatprep.subr.mxu0 0.0
  %648 = vmatpush1.msra.mxu0 0.0
  %649 = vmatprep.subr.mxu0 0.0
  %650 = vmatpush1.msra.mxu0 %v609
  %651 = vmatprep.subr.mxu0 0.0
  %652 = vmatpush1.msra.mxu0 %v604
  %653 = vmatprep.subr.mxu0 0.0
  %654 = vmatpush2.msra.mxu0 0.0
  %655 = vmatprep.subr.mxu0 0.0
  %656 = vmatpush2.msra.mxu0 0.0
  %657 = vmatprep.subr.mxu0 0.0
  %658 = vmatpush2.msra.mxu0 0.0
  %659 = vmatprep.subr.mxu0 0.0
  %660 = vmatpush2.msra.mxu0 0.0
  %661 = vmatprep.subr.mxu0 0.0
  %662 = vmatpush2.msra.mxu0 0.0
  %663 = vmatprep.subr.mxu0 0.0
  %664 = vmatpush2.msra.mxu0 0.0
  %665 = vmatprep.subr.mxu0 0.0
  %666 = vmatpush2.msra.mxu0 0.0
  %667 = vmatprep.subr.mxu0 0.0
  %668 = vmatpush2.msra.mxu0 0.0
  %669 = vmatprep.subr.mxu0 0.0
  %670 = vmatpush2.msra.mxu0 0.0
  %671 = vmatprep.subr.mxu0 0.0
  %672 = vmatpush2.msra.mxu0 0.0
  %673 = vmatprep.subr.mxu0 0.0
  %674 = vmatpush2.msra.mxu0 0.0
  %675 = vmatprep.subr.mxu0 0.0
  %676 = vmatpush2.msra.mxu0 0.0
  %677 = vmatprep.subr.mxu0 0.0
  %678 = vmatpush2.msra.mxu0 0.0
  %679 = vmatprep.subr.mxu0 0.0
  %680 = vmatpush2.msra.mxu0 0.0
  %681 = vmatprep.subr.mxu0 0.0
  %682 = vmatpush2.msra.mxu0 0.0
  %683 = vmatprep.subr.mxu0 0.0
  %684 = vmatpush2.msra.mxu0 0.0
  %685 = vmatprep.mubr.f32.mxu0 0.0
  %686 = vmatmul.mubr.f32.gmra.mxu0 %v616
  %v687 = vpop.f32.mrf.mxu0
  %v688 = vadd.f32 0.0, %v687
  %v689 = vpop.f32.mrf.mxu0
  %690 = vmatprep.mubr.f32.mxu0 0.0
  %691 = vmatmul.mubr.f32.gmra.mxu0 %v619
  %v692 = vpop.f32.mrf.mxu0
  %v693 = vadd.f32 0.0, %v692
  %v694 = vpop.f32.mrf.mxu0
  %695 = vdwg.mxu0
  %v697 = vsel %vm134, %v510, 0
  %v700 = vsel %vm134, %v511, 0
  %702 = vmatprep.subr.mxu0 0.0
  %703 = vmatpush1.msra.mxu0 0.0
  %704 = vmatprep.subr.mxu0 0.0
  %705 = vmatpush1.msra.mxu0 0.0
  %706 = vmatprep.subr.mxu0 0.0
  %707 = vmatpush1.msra.mxu0 0.0
  %708 = vmatprep.subr.mxu0 0.0
  %709 = vmatpush1.msra.mxu0 0.0
  %710 = vmatprep.subr.mxu0 0.0
  %711 = vmatpush1.msra.mxu0 0.0
  %712 = vmatprep.subr.mxu0 0.0
  %713 = vmatpush1.msra.mxu0 0.0
  %714 = vmatprep.subr.mxu0 0.0
  %715 = vmatpush1.msra.mxu0 0.0
  %716 = vmatprep.subr.mxu0 0.0
  %717 = vmatpush1.msra.mxu0 0.0
  %718 = vmatprep.subr.mxu0 0.0
  %719 = vmatpush1.msra.mxu0 0.0
  %720 = vmatprep.subr.mxu0 0.0
  %721 = vmatpush1.msra.mxu0 0.0
  %722 = vmatprep.subr.mxu0 0.0
  %723 = vmatpush1.msra.mxu0 0.0
  %724 = vmatprep.subr.mxu0 0.0
  %725 = vmatpush1.msra.mxu0 0.0
  %726 = vmatprep.subr.mxu0 0.0
  %727 = vmatpush1.msra.mxu0 0.0
  %728 = vmatprep.subr.mxu0 0.0
  %729 = vmatpush1.msra.mxu0 0.0
  %730 = vmatprep.subr.mxu0 0.0
  %731 = vmatpush1.msra.mxu0 %v507
  %732 = vmatprep.subr.mxu0 0.0
  %733 = vmatpush1.msra.mxu0 %v502
  %734 = vmatprep.subr.mxu0 0.0
  %735 = vmatpush2.msra.mxu0 0.0
  %736 = vmatprep.subr.mxu0 0.0
  %737 = vmatpush2.msra.mxu0 0.0
  %738 = vmatprep.subr.mxu0 0.0
  %739 = vmatpush2.msra.mxu0 0.0
  %740 = vmatprep.subr.mxu0 0.0
  %741 = vmatpush2.msra.mxu0 0.0
  %742 = vmatprep.subr.mxu0 0.0
  %743 = vmatpush2.msra.mxu0 0.0
  %744 = vmatprep.subr.mxu0 0.0
  %745 = vmatpush2.msra.mxu0 0.0
  %746 = vmatprep.subr.mxu0 0.0
  %747 = vmatpush2.msra.mxu0 0.0
  %748 = vmatprep.subr.mxu0 0.0
  %749 = vmatpush2.msra.mxu0 0.0
  %750 = vmatprep.subr.mxu0 0.0
  %751 = vmatpush2.msra.mxu0 0.0
  %752 = vmatprep.subr.mxu0 0.0
  %753 = vmatpush2.msra.mxu0 0.0
  %754 = vmatprep.subr.mxu0 0.0
  %755 = vmatpush2.msra.mxu0 0.0
  %756 = vmatprep.subr.mxu0 0.0
  %757 = vmatpush2.msra.mxu0 0.0
  %758 = vmatprep.subr.mxu0 0.0
  %759 = vmatpush2.msra.mxu0 0.0
  %760 = vmatprep.subr.mxu0 0.0
  %761 = vmatpush2.msra.mxu0 0.0
  %762 = vmatprep.subr.mxu0 0.0
  %763 = vmatpush2.msra.mxu0 0.0
  %764 = vmatprep.subr.mxu0 0.0
  %765 = vmatpush2.msra.mxu0 0.0
  %766 = vmatprep.mubr.f32.mxu0 0.0
  %767 = vmatmul.mubr.f32.gmra.mxu0 %v697
  %v768 = vpop.f32.mrf.mxu0
  %v769 = vadd.f32 %v688, %v768
  %v770 = vpop.f32.mrf.mxu0
  %771 = vmatprep.mubr.f32.mxu0 0.0
  %772 = vmatmul.mubr.f32.gmra.mxu0 %v700
  %v773 = vpop.f32.mrf.mxu0
  %v774 = vadd.f32 %v693, %v773
  %v775 = vpop.f32.mrf.mxu0
  %776 = vdwg.mxu0
  %v777 = vld [vmem:[%s6] sm:$0xff]
  %v778 = vld [vmem:[%s6 + $0x8] sm:$0xff]
  %v779 = vld [vmem:[%s6 + $0x10] sm:$0xff]
  %v780 = vld [vmem:[%s6 + $0x18] sm:$0xff]
  %v781 = vld [vmem:[%s6 + $0x20] sm:$0xff]
  %v782 = vld [vmem:[%s6 + $0x28] sm:$0xff]
  %v783 = vld [vmem:[%s6 + $0x30] sm:$0xff]
  %v784 = vld [vmem:[%s6 + $0x38] sm:$0xff]
  %v785 = vld [vmem:[%s6 + $0x40] sm:$0xff]
  %v786 = vld [vmem:[%s6 + $0x48] sm:$0xff]
  %v787 = vld [vmem:[%s6 + $0x50] sm:$0xff]
  %v788 = vld [vmem:[%s6 + $0x58] sm:$0xff]
  %v789 = vld [vmem:[%s6 + $0x60] sm:$0xff]
  %v790 = vld [vmem:[%s6 + $0x68] sm:$0xff]
  %v791 = vld [vmem:[%s6 + $0x70] sm:$0xff]
  %v792 = vld [vmem:[%s6 + $0x78] sm:$0xff]
  %v793 = vld [vmem:[%s7] sm:$0x1]
  %v795 = vlaneseq
  %v796 = vshrl.u32 %v795, 7
  %v797 = vsub.s32 0, %v796
  %v798 = vrot.slane %v793, %v797
  %800 = vmatprep.subr.mxu0 0.0
  %801 = vmatpush1.msra.mxu0 %v792
  %802 = vmatprep.subr.mxu0 0.0
  %803 = vmatpush1.msra.mxu0 %v791
  %804 = vmatprep.subr.mxu0 0.0
  %805 = vmatpush1.msra.mxu0 %v790
  %806 = vmatprep.subr.mxu0 0.0
  %807 = vmatpush1.msra.mxu0 %v789
  %808 = vmatprep.subr.mxu0 0.0
  %809 = vmatpush1.msra.mxu0 %v788
  %810 = vmatprep.subr.mxu0 0.0
  %811 = vmatpush1.msra.mxu0 %v787
  %812 = vmatprep.subr.mxu0 0.0
  %813 = vmatpush1.msra.mxu0 %v786
  %814 = vmatprep.subr.mxu0 0.0
  %815 = vmatpush1.msra.mxu0 %v785
  %816 = vmatprep.subr.mxu0 0.0
  %817 = vmatpush1.msra.mxu0 %v784
  %818 = vmatprep.subr.mxu0 0.0
  %819 = vmatpush1.msra.mxu0 %v783
  %820 = vmatprep.subr.mxu0 0.0
  %821 = vmatpush1.msra.mxu0 %v782
  %822 = vmatprep.subr.mxu0 0.0
  %823 = vmatpush1.msra.mxu0 %v781
  %824 = vmatprep.subr.mxu0 0.0
  %825 = vmatpush1.msra.mxu0 %v780
  %826 = vmatprep.subr.mxu0 0.0
  %827 = vmatpush1.msra.mxu0 %v779
  %828 = vmatprep.subr.mxu0 0.0
  %829 = vmatpush1.msra.mxu0 %v778
  %830 = vmatprep.subr.mxu0 0.0
  %831 = vmatpush1.msra.mxu0 %v777
  %832 = vmatprep.subr.mxu0 0.0
  %833 = vmatpush2.msra.mxu0 0.0
  %834 = vmatprep.subr.mxu0 0.0
  %835 = vmatpush2.msra.mxu0 0.0
  %836 = vmatprep.subr.mxu0 0.0
  %837 = vmatpush2.msra.mxu0 0.0
  %838 = vmatprep.subr.mxu0 0.0
  %839 = vmatpush2.msra.mxu0 0.0
  %840 = vmatprep.subr.mxu0 0.0
  %841 = vmatpush2.msra.mxu0 0.0
  %842 = vmatprep.subr.mxu0 0.0
  %843 = vmatpush2.msra.mxu0 0.0
  %844 = vmatprep.subr.mxu0 0.0
  %845 = vmatpush2.msra.mxu0 0.0
  %846 = vmatprep.subr.mxu0 0.0
  %847 = vmatpush2.msra.mxu0 0.0
  %848 = vmatprep.subr.mxu0 0.0
  %849 = vmatpush2.msra.mxu0 0.0
  %850 = vmatprep.subr.mxu0 0.0
  %851 = vmatpush2.msra.mxu0 0.0
  %852 = vmatprep.subr.mxu0 0.0
  %853 = vmatpush2.msra.mxu0 0.0
  %854 = vmatprep.subr.mxu0 0.0
  %855 = vmatpush2.msra.mxu0 0.0
  %856 = vmatprep.subr.mxu0 0.0
  %857 = vmatpush2.msra.mxu0 0.0
  %858 = vmatprep.subr.mxu0 0.0
  %859 = vmatpush2.msra.mxu0 0.0
  %860 = vmatprep.subr.mxu0 0.0
  %861 = vmatpush2.msra.mxu0 0.0
  %862 = vmatprep.subr.mxu0 0.0
  %863 = vmatpush2.msra.mxu0 0.0
  %864 = vmatprep.mubr.f32.mxu0 0.0
  %865 = vmatmul.mubr.f32.gmra.mxu0 %v769
  %v866 = vpop.f32.mrf.mxu0
  %v867 = vadd.f32 %v798, %v866
  %v868 = vpop.f32.mrf.mxu0
  %869 = vmatprep.mubr.f32.mxu0 0.0
  %870 = vmatmul.mubr.f32.gmra.mxu0 %v774
  %v871 = vpop.f32.mrf.mxu0
  %v872 = vadd.f32 %v798, %v871
  %v873 = vpop.f32.mrf.mxu0
  %874 = vdwg.mxu0
  %875 = vst [vmem:[%s8] sm:$0xff] %v867
  %876 = vst [vmem:[%s8 + $0x8] sm:$0xff] %v872
  // Predicated region
  $region34: #{hetero_rgcn_forward.1} parent=0 // pred_check
    _
  $region35: #{hetero_rgcn_forward.1} parent=0 // pred_check_branch
    %878 = sbr.rel (0) target = $region37
  $region36: #{hetero_rgcn_forward.1} parent=0 // pred_region
    _
  $region37: #{hetero_rgcn_forward.1} parent=0 // pred_fallthru
    _
  // Predicated region
  $region38: #{hetero_rgcn_forward.1} parent=0 // pred_check
    _
  $region39: #{hetero_rgcn_forward.1} parent=0 // pred_check_branch
    %880 = sbr.rel (0) target = $region41
  $region40: #{hetero_rgcn_forward.1} parent=0 // pred_region
    _
  $region41: #{hetero_rgcn_forward.1} parent=0 // pred_fallthru
    _

</llo_original>
